<compile_context>
chip_gen: v7x
topology: tpu7x:2x2x1
jax: 0.10.0
libtpu: 0.0.40
codegen_flags: <defaults>
</compile_context>

<pallas_src>
from functools import partial

import numpy as np

import jax
import jax.numpy as jnp
from jax import lax
from jax.experimental import pallas as pl
from jax.experimental.pallas import tpu as pltpu


_PAD_TOP = 16   # bf16 (16,128) tile-aligned start of the scratch interior


# ------------------------------ Pallas kernel -------------------------------


def _basic_block_kernel(x_ref, b1_ref, b2_ref, bias_ref, out_ref, pad_ref):
    """Fused BasicBlock forward for one group of FOLD images.

    x_ref   : (1, H, L)  f32   L = FOLD*W*C, images folded into the lane axis
    b1_ref  : (3, L, L)  bf16  block-diag width-banded conv1 weights (BN scale folded)
    b2_ref  : (3, L, L)  bf16  block-diag width-banded conv2 weights (BN scale folded)
    bias_ref: (2, L)     f32   row 0 = bn1 bias, row 1 = bn2 bias (pre-broadcast)
    out_ref : (1, H, L)  f32
    pad_ref : (_PAD_TOP+H+16, L) bf16 scratch; interior rows [_PAD_TOP, _PAD_TOP+H),
              zero halo rows at _PAD_TOP-1 and _PAD_TOP+H.  Rows outside that
              window are never read or written.
    """
    H = out_ref.shape[1]
    L = out_ref.shape[2]
    top = _PAD_TOP

    x = x_ref[0]                                   # (H, L) f32, residual (stays in VMEM)

    # Zero only the two halo rows (column padding is baked into the weights).
    zero_row = jnp.zeros((1, L), pad_ref.dtype)
    pad_ref[top - 1:top, :] = zero_row
    pad_ref[top + H:top + H + 1, :] = zero_row

    # One-time bf16 cast of the conv1 input into the aligned scratch interior.
    pad_ref[top:top + H, :] = x.astype(jnp.bfloat16)

    def conv3x3(b_ref):
        # 3 MXU contractions; each kh tap is a pure sublane-offset slice (bf16).
        acc = jnp.zeros((H, L), jnp.float32)
        for kh in range(3):
            lhs = pad_ref[top - 1 + kh:top - 1 + kh + H, :]
            acc += jnp.dot(lhs, b_ref[kh], preferred_element_type=jnp.float32)
        return acc

    # conv1 (+ folded bn1 scale) -> + bn1 bias -> relu   (never leaves VMEM)
    y1 = jnp.maximum(conv3x3(b1_ref) + bias_ref[0:1, :], 0.0)

    # conv2 input: overwrite the interior (halo rows stay zero), bf16 once.
    pad_ref[top:top + H, :] = y1.astype(jnp.bfloat16)

    # conv2 (+ folded bn2 scale) -> + bn2 bias -> + identity -> relu
    y2 = conv3x3(b2_ref) + bias_ref[1:2, :] + x
    out_ref[0] = jnp.maximum(y2, 0.0).astype(out_ref.dtype)


# ------------------------------ parameter prep ------------------------------


def init_basic_block_params(key, inplanes, planes, eps=1e-5):
    """Deterministic synthetic parameters (conv weights + eval-mode BN)."""
    assert inplanes == planes, "stride=1 / downsample=None requires equal planes"
    ks = jax.random.split(key, 10)

    def conv_w(k, cin, cout):
        # PyTorch OIHW -> HWIO
        w_oihw = 0.1 * jax.random.normal(k, (cout, cin, 3, 3), jnp.float32)
        return jnp.transpose(w_oihw, (2, 3, 1, 0))

    def bn(kg, kb, km, kv, c):
        gamma = 1.0 + 0.1 * jax.random.normal(kg, (c,), jnp.float32)
        beta = 0.1 * jax.random.normal(kb, (c,), jnp.float32)
        mean = 0.1 * jax.random.normal(km, (c,), jnp.float32)
        var = jnp.abs(jax.random.normal(kv, (c,), jnp.float32)) + 0.5
        scale = gamma / jnp.sqrt(var + eps)
        bias = beta - mean * scale
        return scale, bias

    w1 = conv_w(ks[0], inplanes, planes)
    w2 = conv_w(ks[1], planes, planes)
    scale1, bias1 = bn(ks[2], ks[3], ks[4], ks[5], planes)
    scale2, bias2 = bn(ks[6], ks[7], ks[8], ks[9], planes)
    return dict(w1=w1, w2=w2, scale1=scale1, bias1=bias1,
                scale2=scale2, bias2=bias2)


def _banded_conv3x3_weights(w_hwio, scale, width, fold):
    """HWIO (3,3,Cin,Cout) + per-out-channel BN scale ->
    (3, fold*width*Cin, fold*width*Cout) bf16, width-banded and block-diagonal
    over the folded images.

    Per image: B[kh, p*Cin+ci, w*Cout+co] = scale[co] * W[kh, kw, ci, co]
    with p = w + kw - 1 (entries outside [0, width) dropped == zero W padding).
    The BN scale is folded in f32 before the bf16 cast.
    """
    w = np.asarray(w_hwio, np.float32) * np.asarray(scale, np.float32)[None, None, None, :]
    _, _, cin, cout = w.shape
    band = np.zeros((3, width, cin, width, cout), np.float32)
    for kh in range(3):
        for kw in range(3):
            for col in range(width):
                p = col + kw - 1
                if 0 <= p < width:
                    band[kh, p, :, col, :] = w[kh, kw]
    band = band.reshape(3, width * cin, width * cout)

    # Block-diagonal over the folded images (images never mix).
    li, lo = fold * width * cin, fold * width * cout
    full = np.zeros((3, li, lo), np.float32)
    for f in range(fold):
        full[:, f * width * cin:(f + 1) * width * cin,
             f * width * cout:(f + 1) * width * cout] = band
    return jnp.asarray(full, jnp.bfloat16)


def prepare_kernel_params(raw, width, fold):
    """Host-side, one-time transformation of raw params into kernel layout."""
    cin, cout = raw["w1"].shape[2], raw["w1"].shape[3]
    assert cin == cout

    def tile_bias(v):  # (C,) -> (fold*width*C,), matching the (f, w, c) lane flatten
        return np.tile(np.asarray(v, np.float32), fold * width)

    bias = jnp.asarray(np.stack([tile_bias(raw["bias1"]),
                                 tile_bias(raw["bias2"])], axis=0))
    return dict(
        b1=_banded_conv3x3_weights(raw["w1"], raw["scale1"], width, fold),
        b2=_banded_conv3x3_weights(raw["w2"], raw["scale2"], width, fold),
        bias=bias,
    )


# ------------------------------ forward wrapper ------------------------------


@jax.jit
def basic_block_forward(x_nchw, kparams):
    """BasicBlock.forward (stride=1, downsample=None, BN in eval mode)."""
    N, C, H, W = x_nchw.shape
    L = kparams["b1"].shape[1]          # FOLD * W * C
    fold = L // (W * C)
    assert N % fold == 0, "batch must be divisible by the image-fold factor"
    G = N // fold

    # NCHW -> NHWC -> (G, fold, H, W*C) -> (G, H, fold*W*C): images folded into lanes.
    x_nhwc = jnp.transpose(x_nchw, (0, 2, 3, 1)).astype(jnp.float32)
    x2d = x_nhwc.reshape(G, fold, H, W * C)
    x2d = jnp.transpose(x2d, (0, 2, 1, 3)).reshape(G, H, L)

    out2d = pl.pallas_call(
        _basic_block_kernel,
        out_shape=jax.ShapeDtypeStruct((G, H, L), jnp.float32),
        grid_spec=pltpu.PrefetchScalarGridSpec(
            num_scalar_prefetch=0,
            grid=(G,),
            in_specs=[
                pl.BlockSpec((1, H, L), lambda g: (g, 0, 0)),
                pl.BlockSpec((3, L, L), lambda g: (0, 0, 0)),
                pl.BlockSpec((3, L, L), lambda g: (0, 0, 0)),
                pl.BlockSpec((2, L), lambda g: (0, 0)),
            ],
            out_specs=pl.BlockSpec((1, H, L), lambda g: (g, 0, 0)),
            scratch_shapes=[pltpu.VMEM((_PAD_TOP + H + 16, L), jnp.bfloat16)],
        ),
        compiler_params=pltpu.CompilerParams(
            dimension_semantics=("parallel",),
            vmem_limit_bytes=32 * 1024 * 1024,
        ),
    )(x2d, kparams["b1"], kparams["b2"], kparams["bias"])

    # (G, H, fold*W*C) -> (G, fold, C, H, W) -> NCHW
    out = out2d.reshape(G, H, fold, W, C)
    out = jnp.transpose(out, (0, 2, 4, 1, 3))
    return out.reshape(N, C, H, W)


# ------------------------------ reference & test -----------------------------


def _reference_forward(x_nchw, raw):
    """Pure-JAX reference mirroring the kernel's policy: BN scale folded into
    bf16 weights, f32 accumulation, f32 bias/residual/ReLU."""
    x = jnp.transpose(x_nchw, (0, 2, 3, 1)).astype(jnp.float32)
    dn = ("NHWC", "HWIO", "NHWC")

    def conv(inp, w, scale):
        w_s = (w.astype(jnp.float32) * scale).astype(jnp.bfloat16)
        return lax.conv_general_dilated(
            inp.astype(jnp.bfloat16), w_s,
            (1, 1), ((1, 1), (1, 1)), dimension_numbers=dn,
            preferred_element_type=jnp.float32)

    y1 = jnp.maximum(conv(x, raw["w1"], raw["scale1"]) + raw["bias1"], 0.0)
    y2 = conv(y1, raw["w2"], raw["scale2"]) + raw["bias2"] + x
    return jnp.transpose(jnp.maximum(y2, 0.0), (0, 3, 1, 2))


if __name__ == "__main__":
    key = jax.random.PRNGKey(0)
    kx, kp = jax.random.split(key)

    N, C, H, W = 2, 4, 16, 16          # inplanes = planes = 4, stride = 1
    x = jax.random.normal(kx, (N, C, H, W), jnp.float32)

    # Fold as many images into the lane axis as fit in 128 lanes (W*C=64 -> fold=2),
    # which also collapses the grid to a single step for N=2.
    wc = W * C
    fold = max(1, min(N, 128 // wc))
    while N % fold != 0:
        fold -= 1

    raw = init_basic_block_params(kp, inplanes=C, planes=C)
    kparams = prepare_kernel_params(raw, width=W, fold=fold)

    out = jax.block_until_ready(basic_block_forward(x, kparams))
    ref = _reference_forward(x, raw)

    assert out.shape == (N, C, H, W)
    err = float(jnp.max(jnp.abs(out - ref)))
    assert jnp.allclose(out, ref, atol=1e-3, rtol=1e-3), f"mismatch vs ref: {err}"

    print("KERNEL_OK")
</pallas_src>

<mosaic_0001>
module attributes {stable_mosaic.version = 11 : i64} {
  func.func @_basic_block_kernel(%arg0: i32, %arg1: memref<1x16x128xf32, #tpu.memory_space<vmem>>, %arg2: memref<3x128x128xbf16, #tpu.memory_space<vmem>>, %arg3: memref<3x128x128xbf16, #tpu.memory_space<vmem>>, %arg4: memref<2x128xf32, #tpu.memory_space<vmem>>, %arg5: memref<1x16x128xf32, #tpu.memory_space<vmem>>, %arg6: memref<48x128xbf16, #tpu.memory_space<vmem>>) attributes {dimension_semantics = [#tpu.dimension_semantics<parallel>], iteration_bounds = array<i64: 1>, scalar_prefetch = 0 : i64, scratch_operands = 1 : i64, tpu.core_type = #tpu.core_type<tc>, window_params = [{transform_indices = @transform_0, window_bounds = array<i64: 1, 16, 128>}, {pipeline_mode = #tpu.pipeline_mode<synchronous>, transform_indices = @transform_1, window_bounds = array<i64: 3, 128, 128>}, {pipeline_mode = #tpu.pipeline_mode<synchronous>, transform_indices = @transform_2, window_bounds = array<i64: 3, 128, 128>}, {pipeline_mode = #tpu.pipeline_mode<synchronous>, transform_indices = @transform_3, window_bounds = array<i64: 2, 128>}, {transform_indices = @transform_4, window_bounds = array<i64: 1, 16, 128>}]} {
    %c0 = arith.constant 0 : index
    %c0_0 = arith.constant 0 : index
    %c0_1 = arith.constant 0 : index
    %0 = vector.load %arg1[%c0, %c0_0, %c0_1] : memref<1x16x128xf32, #tpu.memory_space<vmem>>, vector<1x16x128xf32>
    %1 = vector.shape_cast %0 : vector<1x16x128xf32> to vector<16x128xf32>
    %cst = arith.constant 0.000000e+00 : bf16
    %2 = vector.broadcast %cst : bf16 to vector<1x128xbf16>
    %c15 = arith.constant 15 : index
    %c0_2 = arith.constant 0 : index
    %3 = vector.load %arg6[%c15, %c0_2] : memref<48x128xbf16, #tpu.memory_space<vmem>>, vector<1x128xbf16>
    tpu.vector_store %arg6[%c15, %c0_2], %2 {strides = array<i32>} : memref<48x128xbf16, #tpu.memory_space<vmem>>, vector<1x128xbf16>,
    %c32 = arith.constant 32 : index
    %c0_3 = arith.constant 0 : index
    %4 = vector.load %arg6[%c32, %c0_3] : memref<48x128xbf16, #tpu.memory_space<vmem>>, vector<1x128xbf16>
    tpu.vector_store %arg6[%c32, %c0_3], %2 {strides = array<i32>} : memref<48x128xbf16, #tpu.memory_space<vmem>>, vector<1x128xbf16>,
    %5 = arith.truncf %1 : vector<16x128xf32> to vector<16x128xbf16>
    %c16 = arith.constant 16 : index
    %c0_4 = arith.constant 0 : index
    %6 = vector.load %arg6[%c16, %c0_4] : memref<48x128xbf16, #tpu.memory_space<vmem>>, vector<16x128xbf16>
    tpu.vector_store %arg6[%c16, %c0_4], %5 {strides = array<i32>} : memref<48x128xbf16, #tpu.memory_space<vmem>>, vector<16x128xbf16>,
    %cst_5 = arith.constant 0.000000e+00 : f32
    %7 = vector.broadcast %cst_5 : f32 to vector<16x128xf32>
    %c15_6 = arith.constant 15 : index
    %c0_7 = arith.constant 0 : index
    %8 = vector.load %arg6[%c15_6, %c0_7] : memref<48x128xbf16, #tpu.memory_space<vmem>>, vector<16x128xbf16>
    %c0_8 = arith.constant 0 : index
    %c0_9 = arith.constant 0 : index
    %c0_10 = arith.constant 0 : index
    %9 = vector.load %arg2[%c0_8, %c0_9, %c0_10] : memref<3x128x128xbf16, #tpu.memory_space<vmem>>, vector<1x128x128xbf16>
    %10 = vector.shape_cast %9 : vector<1x128x128xbf16> to vector<128x128xbf16>
    %cst_11 = arith.constant dense<0.000000e+00> : vector<16x128xf32>
    %11 = tpu.matmul %8, %10, %cst_11 {dimension_numbers = #tpu.dot_dimension_numbers<[1], [0], [0], [1], [0, 0, 1, 1], [], []>} : vector<16x128xbf16>, vector<128x128xbf16>, vector<16x128xf32> -> vector<16x128xf32>
    %12 = arith.addf %7, %11 : vector<16x128xf32>
    %c16_12 = arith.constant 16 : index
    %c0_13 = arith.constant 0 : index
    %13 = vector.load %arg6[%c16_12, %c0_13] : memref<48x128xbf16, #tpu.memory_space<vmem>>, vector<16x128xbf16>
    %c1 = arith.constant 1 : index
    %c0_14 = arith.constant 0 : index
    %c0_15 = arith.constant 0 : index
    %14 = vector.load %arg2[%c1, %c0_14, %c0_15] : memref<3x128x128xbf16, #tpu.memory_space<vmem>>, vector<1x128x128xbf16>
    %15 = vector.shape_cast %14 : vector<1x128x128xbf16> to vector<128x128xbf16>
    %cst_16 = arith.constant dense<0.000000e+00> : vector<16x128xf32>
    %16 = tpu.matmul %13, %15, %cst_16 {dimension_numbers = #tpu.dot_dimension_numbers<[1], [0], [0], [1], [0, 0, 1, 1], [], []>} : vector<16x128xbf16>, vector<128x128xbf16>, vector<16x128xf32> -> vector<16x128xf32>
    %17 = arith.addf %12, %16 : vector<16x128xf32>
    %c17 = arith.constant 17 : index
    %c0_17 = arith.constant 0 : index
    %18 = vector.load %arg6[%c17, %c0_17] : memref<48x128xbf16, #tpu.memory_space<vmem>>, vector<16x128xbf16>
    %c2 = arith.constant 2 : index
    %c0_18 = arith.constant 0 : index
    %c0_19 = arith.constant 0 : index
    %19 = vector.load %arg2[%c2, %c0_18, %c0_19] : memref<3x128x128xbf16, #tpu.memory_space<vmem>>, vector<1x128x128xbf16>
    %20 = vector.shape_cast %19 : vector<1x128x128xbf16> to vector<128x128xbf16>
    %cst_20 = arith.constant dense<0.000000e+00> : vector<16x128xf32>
    %21 = tpu.matmul %18, %20, %cst_20 {dimension_numbers = #tpu.dot_dimension_numbers<[1], [0], [0], [1], [0, 0, 1, 1], [], []>} : vector<16x128xbf16>, vector<128x128xbf16>, vector<16x128xf32> -> vector<16x128xf32>
    %22 = arith.addf %17, %21 : vector<16x128xf32>
    %c0_21 = arith.constant 0 : index
    %c0_22 = arith.constant 0 : index
    %23 = vector.load %arg4[%c0_21, %c0_22] : memref<2x128xf32, #tpu.memory_space<vmem>>, vector<1x128xf32>
    %24 = vector.broadcast %23 : vector<1x128xf32> to vector<16x128xf32>
    %25 = arith.addf %22, %24 : vector<16x128xf32>
    %cst_23 = arith.constant 0.000000e+00 : f32
    %26 = vector.broadcast %cst_23 : f32 to vector<16x128xf32>
    %27 = arith.maximumf %25, %26 : vector<16x128xf32>
    %28 = arith.truncf %27 : vector<16x128xf32> to vector<16x128xbf16>
    %c16_24 = arith.constant 16 : index
    %c0_25 = arith.constant 0 : index
    %29 = vector.load %arg6[%c16_24, %c0_25] : memref<48x128xbf16, #tpu.memory_space<vmem>>, vector<16x128xbf16>
    tpu.vector_store %arg6[%c16_24, %c0_25], %28 {strides = array<i32>} : memref<48x128xbf16, #tpu.memory_space<vmem>>, vector<16x128xbf16>,
    %cst_26 = arith.constant 0.000000e+00 : f32
    %30 = vector.broadcast %cst_26 : f32 to vector<16x128xf32>
    %c15_27 = arith.constant 15 : index
    %c0_28 = arith.constant 0 : index
    %31 = vector.load %arg6[%c15_27, %c0_28] : memref<48x128xbf16, #tpu.memory_space<vmem>>, vector<16x128xbf16>
    %c0_29 = arith.constant 0 : index
    %c0_30 = arith.constant 0 : index
    %c0_31 = arith.constant 0 : index
    %32 = vector.load %arg3[%c0_29, %c0_30, %c0_31] : memref<3x128x128xbf16, #tpu.memory_space<vmem>>, vector<1x128x128xbf16>
    %33 = vector.shape_cast %32 : vector<1x128x128xbf16> to vector<128x128xbf16>
    %cst_32 = arith.constant dense<0.000000e+00> : vector<16x128xf32>
    %34 = tpu.matmul %31, %33, %cst_32 {dimension_numbers = #tpu.dot_dimension_numbers<[1], [0], [0], [1], [0, 0, 1, 1], [], []>} : vector<16x128xbf16>, vector<128x128xbf16>, vector<16x128xf32> -> vector<16x128xf32>
    %35 = arith.addf %30, %34 : vector<16x128xf32>
    %c16_33 = arith.constant 16 : index
    %c0_34 = arith.constant 0 : index
    %36 = vector.load %arg6[%c16_33, %c0_34] : memref<48x128xbf16, #tpu.memory_space<vmem>>, vector<16x128xbf16>
    %c1_35 = arith.constant 1 : index
    %c0_36 = arith.constant 0 : index
    %c0_37 = arith.constant 0 : index
    %37 = vector.load %arg3[%c1_35, %c0_36, %c0_37] : memref<3x128x128xbf16, #tpu.memory_space<vmem>>, vector<1x128x128xbf16>
    %38 = vector.shape_cast %37 : vector<1x128x128xbf16> to vector<128x128xbf16>
    %cst_38 = arith.constant dense<0.000000e+00> : vector<16x128xf32>
    %39 = tpu.matmul %36, %38, %cst_38 {dimension_numbers = #tpu.dot_dimension_numbers<[1], [0], [0], [1], [0, 0, 1, 1], [], []>} : vector<16x128xbf16>, vector<128x128xbf16>, vector<16x128xf32> -> vector<16x128xf32>
    %40 = arith.addf %35, %39 : vector<16x128xf32>
    %c17_39 = arith.constant 17 : index
    %c0_40 = arith.constant 0 : index
    %41 = vector.load %arg6[%c17_39, %c0_40] : memref<48x128xbf16, #tpu.memory_space<vmem>>, vector<16x128xbf16>
    %c2_41 = arith.constant 2 : index
    %c0_42 = arith.constant 0 : index
    %c0_43 = arith.constant 0 : index
    %42 = vector.load %arg3[%c2_41, %c0_42, %c0_43] : memref<3x128x128xbf16, #tpu.memory_space<vmem>>, vector<1x128x128xbf16>
    %43 = vector.shape_cast %42 : vector<1x128x128xbf16> to vector<128x128xbf16>
    %cst_44 = arith.constant dense<0.000000e+00> : vector<16x128xf32>
    %44 = tpu.matmul %41, %43, %cst_44 {dimension_numbers = #tpu.dot_dimension_numbers<[1], [0], [0], [1], [0, 0, 1, 1], [], []>} : vector<16x128xbf16>, vector<128x128xbf16>, vector<16x128xf32> -> vector<16x128xf32>
    %45 = arith.addf %40, %44 : vector<16x128xf32>
    %c1_45 = arith.constant 1 : index
    %c0_46 = arith.constant 0 : index
    %46 = vector.load %arg4[%c1_45, %c0_46] : memref<2x128xf32, #tpu.memory_space<vmem>>, vector<1x128xf32>
    %47 = vector.broadcast %46 : vector<1x128xf32> to vector<16x128xf32>
    %48 = arith.addf %45, %47 : vector<16x128xf32>
    %49 = arith.addf %48, %1 : vector<16x128xf32>
    %cst_47 = arith.constant 0.000000e+00 : f32
    %50 = vector.broadcast %cst_47 : f32 to vector<16x128xf32>
    %51 = arith.maximumf %49, %50 : vector<16x128xf32>
    %c0_48 = arith.constant 0 : index
    %c0_49 = arith.constant 0 : index
    %c0_50 = arith.constant 0 : index
    %52 = vector.load %arg5[%c0_48, %c0_49, %c0_50] : memref<1x16x128xf32, #tpu.memory_space<vmem>>, vector<1x16x128xf32>
    %53 = vector.shape_cast %52 : vector<1x16x128xf32> to vector<16x128xf32>
    %54 = vector.shape_cast %51 : vector<16x128xf32> to vector<1x16x128xf32>
    tpu.vector_store %arg5[%c0_48, %c0_49, %c0_50], %54 {strides = array<i32>} : memref<1x16x128xf32, #tpu.memory_space<vmem>>, vector<1x16x128xf32>,
    return
  }
  func.func @transform_0(%arg0: i32) -> (i32, i32, i32) {
    %c0_i32 = arith.constant 0 : i32
    %c0_i32_0 = arith.constant 0 : i32
    %c0_i32_1 = arith.constant 0 : i32
    return %arg0, %c0_i32, %c0_i32_0 : i32, i32, i32
  }
  func.func @transform_1(%arg0: i32) -> (i32, i32, i32) {
    %c0_i32 = arith.constant 0 : i32
    %c0_i32_0 = arith.constant 0 : i32
    %c0_i32_1 = arith.constant 0 : i32
    %c0_i32_2 = arith.constant 0 : i32
    return %c0_i32, %c0_i32_0, %c0_i32_1 : i32, i32, i32
  }
  func.func @transform_2(%arg0: i32) -> (i32, i32, i32) {
    %c0_i32 = arith.constant 0 : i32
    %c0_i32_0 = arith.constant 0 : i32
    %c0_i32_1 = arith.constant 0 : i32
    %c0_i32_2 = arith.constant 0 : i32
    return %c0_i32, %c0_i32_0, %c0_i32_1 : i32, i32, i32
  }
  func.func @transform_3(%arg0: i32) -> (i32, i32) {
    %c0_i32 = arith.constant 0 : i32
    %c0_i32_0 = arith.constant 0 : i32
    %c0_i32_1 = arith.constant 0 : i32
    return %c0_i32, %c0_i32_0 : i32, i32
  }
  func.func @transform_4(%arg0: i32) -> (i32, i32, i32) {
    %c0_i32 = arith.constant 0 : i32
    %c0_i32_0 = arith.constant 0 : i32
    %c0_i32_1 = arith.constant 0 : i32
    return %arg0, %c0_i32, %c0_i32_0 : i32, i32, i32
  }
}

</mosaic_0001>

<llo_original>
// kernel: basic_block_forward.1
$region0: #{basic_block_forward.1}
  #allocation0 [shape = 'u32[]', space=smem, size = 0x4, offset = 0x4, fixed_abs, tag = 'smem constant byte address 0x4 - core index']
  #allocation1 [shape = 'u32[144,128]{1,0:T(1,128)}', space=vmem, size = 0x12000, scoped, tag = 'internal scratch']
  #allocation2 [shape = 'bf16[48,128]{1,0:T(16,128)(2,1)}', space=vmem, size = 0x3000, scoped, tag = 'scratch operand']
  %s0 = inlined_call_operand.vmem [shape: f32[1,16,128], index: 0, kind: input, shape index: {}]
  %s1 = inlined_call_operand.vmem [shape: bf16[3,128,128], index: 1, kind: input, shape index: {}]
  %s2 = inlined_call_operand.vmem [shape: bf16[3,128,128], index: 2, kind: input, shape index: {}]
  %s3 = inlined_call_operand.vmem [shape: f32[2,128], index: 3, kind: input, shape index: {}]
  %s4 = inlined_call_operand.vmem [shape: f32[1,16,128], index: 4, kind: output, shape index: {}]
  %s5 = sld [smem:[#allocation0]]
  $region26: #{basic_block_forward.1} parent=0
    _
  %s7 = ssub.s32 1, %s5
  %s8 = scalar_select 0, %s7, %s5
  // Predicated region
  $region2: #{basic_block_forward.1} parent=0 // pred_check
    _
  $region3: #{basic_block_forward.1} parent=0 // pred_check_branch
    %10 = sbr.rel (0) target = $region5
  $region4: #{basic_block_forward.1} parent=0 // pred_region
    _
  $region5: #{basic_block_forward.1} parent=0 // pred_fallthru
    _
  // Predicated region
  $region6: #{basic_block_forward.1} parent=0 // pred_check
    _
  $region7: #{basic_block_forward.1} parent=0 // pred_check_branch
    %12 = sbr.rel (0) target = $region9
  $region8: #{basic_block_forward.1} parent=0 // pred_region
    _
  $region9: #{basic_block_forward.1} parent=0 // pred_fallthru
    _
  // Predicated region
  $region10: #{basic_block_forward.1} parent=0 // pred_check
    _
  $region11: #{basic_block_forward.1} parent=0 // pred_check_branch
    %14 = sbr.rel (0) target = $region13
  $region12: #{basic_block_forward.1} parent=0 // pred_region
    _
  $region13: #{basic_block_forward.1} parent=0 // pred_fallthru
    _
  // Predicated region
  $region14: #{basic_block_forward.1} parent=0 // pred_check
    _
  $region15: #{basic_block_forward.1} parent=0 // pred_check_branch
    %16 = sbr.rel (0) target = $region17
  $region16: #{basic_block_forward.1} parent=0 // pred_region
    _
  $region17: #{basic_block_forward.1} parent=0 // pred_fallthru
    _
  %v18 = vld [vmem:[%s0] sm:$0xff]
  %v19 = vld [vmem:[%s0 + $0x8] sm:$0xff]
  %vm20 = vcmask 1047559
  %vm21 = vsmask.f32 7966
  %vm22 = vmand %vm20, %vm21
  %v23 = vld [vmem:[#allocation2] sm:$0x80]
  %v24 = vsel %vm22, 0, %v23
  %25 = vst [vmem:[#allocation2] sm:$0x80] %v24
  %vm26 = vcmask 1040384
  %vm27 = vsmask.f32 256
  %vm28 = vmand %vm26, %vm27
  %v29 = vld [vmem:[#allocation2 + $0x10] sm:$0x1]
  %v30 = vsel %vm28, 0, %v29
  %31 = vst [vmem:[#allocation2 + $0x10] sm:$0x1] %v30
  %v32 = vpack.c.bf16 %v19, %v18
  %33 = vst [vmem:[#allocation2 + $0x8] sm:$0xff] %v32
  %v34 = vld [vmem:[#allocation2] sm:$0x80]
  %v35 = vld [vmem:[#allocation2 + $0x8] sm:$0xff]
  %v36 = vld [vmem:[%s1] sm:$0xf]
  %v37 = vld [vmem:[%s1 + $0x4] sm:$0xf]
  %v38 = vld [vmem:[%s1 + $0x8] sm:$0xf]
  %v39 = vld [vmem:[%s1 + $0xc] sm:$0xf]
  %v40 = vld [vmem:[%s1 + $0x10] sm:$0xf]
  %v41 = vld [vmem:[%s1 + $0x14] sm:$0xf]
  %v42 = vld [vmem:[%s1 + $0x18] sm:$0xf]
  %v43 = vld [vmem:[%s1 + $0x1c] sm:$0xf]
  %v44 = vld [vmem:[%s1 + $0x20] sm:$0xf]
  %v45 = vld [vmem:[%s1 + $0x24] sm:$0xf]
  %v46 = vld [vmem:[%s1 + $0x28] sm:$0xf]
  %v47 = vld [vmem:[%s1 + $0x2c] sm:$0xf]
  %v48 = vld [vmem:[%s1 + $0x30] sm:$0xf]
  %v49 = vld [vmem:[%s1 + $0x34] sm:$0xf]
  %v50 = vld [vmem:[%s1 + $0x38] sm:$0xf]
  %v51 = vld [vmem:[%s1 + $0x3c] sm:$0xf]
  %s52 = scalar_lea.vmem %s1, 64
  %v53 = vld [vmem:[%s52] sm:$0xf]
  %v54 = vld [vmem:[%s52 + $0x4] sm:$0xf]
  %v55 = vld [vmem:[%s52 + $0x8] sm:$0xf]
  %v56 = vld [vmem:[%s52 + $0xc] sm:$0xf]
  %v57 = vld [vmem:[%s52 + $0x10] sm:$0xf]
  %v58 = vld [vmem:[%s52 + $0x14] sm:$0xf]
  %v59 = vld [vmem:[%s52 + $0x18] sm:$0xf]
  %v60 = vld [vmem:[%s52 + $0x1c] sm:$0xf]
  %v61 = vld [vmem:[%s52 + $0x20] sm:$0xf]
  %v62 = vld [vmem:[%s52 + $0x24] sm:$0xf]
  %v63 = vld [vmem:[%s52 + $0x28] sm:$0xf]
  %v64 = vld [vmem:[%s52 + $0x2c] sm:$0xf]
  %v65 = vld [vmem:[%s52 + $0x30] sm:$0xf]
  %v66 = vld [vmem:[%s52 + $0x34] sm:$0xf]
  %v67 = vld [vmem:[%s52 + $0x38] sm:$0xf]
  %v68 = vld [vmem:[%s52 + $0x3c] sm:$0xf]
  %v85 = vunpack.c.l.b16 %v53
  %v86 = vunpack.c.l.b16 %v54
  %v87 = vunpack.c.l.b16 %v55
  %v88 = vunpack.c.l.b16 %v56
  %v89 = vunpack.c.l.b16 %v57
  %v90 = vunpack.c.l.b16 %v58
  %v91 = vunpack.c.l.b16 %v59
  %v92 = vunpack.c.l.b16 %v60
  %v93 = vunpack.c.l.b16 %v61
  %v94 = vunpack.c.l.b16 %v62
  %v95 = vunpack.c.l.b16 %v63
  %v96 = vunpack.c.l.b16 %v64
  %v97 = vunpack.c.l.b16 %v65
  %v98 = vunpack.c.l.b16 %v66
  %v99 = vunpack.c.l.b16 %v67
  %v100 = vunpack.c.l.b16 %v68
  %v101 = vpack.c.b16 %v86, %v85
  %v102 = vpack.c.b16 %v88, %v87
  %v103 = vpack.c.b16 %v90, %v89
  %v104 = vpack.c.b16 %v92, %v91
  %v105 = vpack.c.b16 %v94, %v93
  %v106 = vpack.c.b16 %v96, %v95
  %v107 = vpack.c.b16 %v98, %v97
  %v108 = vpack.c.b16 %v100, %v99
  %117 = vmatprep.subr.bf16.mxu0 0
  %118 = vmatpush1.bf16.msra.mxu0 %v101
  %119 = vmatprep.subr.bf16.mxu0 0
  %120 = vmatpush1.bf16.msra.mxu0 %v102
  %121 = vmatprep.subr.bf16.mxu0 0
  %122 = vmatpush1.bf16.msra.mxu0 %v103
  %123 = vmatprep.subr.bf16.mxu0 0
  %124 = vmatpush1.bf16.msra.mxu0 %v104
  %125 = vmatprep.subr.bf16.mxu0 0
  %126 = vmatpush1.bf16.msra.mxu0 %v105
  %127 = vmatprep.subr.bf16.mxu0 0
  %128 = vmatpush1.bf16.msra.mxu0 %v106
  %129 = vmatprep.subr.bf16.mxu0 0
  %130 = vmatpush1.bf16.msra.mxu0 %v107
  %131 = vmatprep.subr.bf16.mxu0 0
  %132 = vmatpush1.bf16.msra.mxu0 %v108
  %133 = vmatprep.subr.bf16.mxu0 0
  %134 = vmatpush1.bf16.msra.mxu0 0
  %135 = vmatprep.subr.bf16.mxu0 0
  %136 = vmatpush1.bf16.msra.mxu0 0
  %137 = vmatprep.subr.bf16.mxu0 0
  %138 = vmatpush1.bf16.msra.mxu0 0
  %139 = vmatprep.subr.bf16.mxu0 0
  %140 = vmatpush1.bf16.msra.mxu0 0
  %141 = vmatprep.subr.bf16.mxu0 0
  %142 = vmatpush1.bf16.msra.mxu0 0
  %143 = vmatprep.subr.bf16.mxu0 0
  %144 = vmatpush1.bf16.msra.mxu0 0
  %145 = vmatprep.subr.bf16.mxu0 0
  %146 = vmatpush1.bf16.msra.mxu0 0
  %147 = vmatprep.subr.bf16.mxu0 0
  %148 = vmatpush1.bf16.msra.mxu0 0
  %149 = vmatprep.mubr.bf16.mxu0 0
  %150 = vmatmul.mubr.bf16.gmra.mrb[0].mxu0 %v35
  %v151 = vpop.f32.mrb[0].mxu0
  %v152 = vadd.f32 0.0, %v151
  %v153 = vpop.f32.mrb[0].mxu0
  %v154 = vpop.f32.mrb[0].mxu0
  %v155 = vadd.f32 0.0, %v154
  %v156 = vpop.f32.mrb[0].mxu0
  %157 = vdwg.mxu0
  %v159 = vshrl.u32 %v34, 16
  %v161 = vrot.slane %v159, 7
  %v163 = vshrl.u32 %v35, 16
  %v165 = vrot.slane %v163, 7
  %v166 = vshll.u32 %v35, 16
  %v168 = vor.u32 %v165, %v166
  %v169 = vsel %vm27, %v161, %v168
  %v187 = vunpack.c.l.b16 %v36
  %v188 = vunpack.c.l.b16 %v37
  %v189 = vunpack.c.l.b16 %v38
  %v190 = vunpack.c.l.b16 %v39
  %v191 = vunpack.c.l.b16 %v40
  %v192 = vunpack.c.l.b16 %v41
  %v193 = vunpack.c.l.b16 %v42
  %v194 = vunpack.c.l.b16 %v43
  %v195 = vunpack.c.l.b16 %v44
  %v196 = vunpack.c.l.b16 %v45
  %v197 = vunpack.c.l.b16 %v46
  %v198 = vunpack.c.l.b16 %v47
  %v199 = vunpack.c.l.b16 %v48
  %v200 = vunpack.c.l.b16 %v49
  %v201 = vunpack.c.l.b16 %v50
  %v202 = vunpack.c.l.b16 %v51
  %v203 = vpack.c.b16 %v188, %v187
  %v204 = vpack.c.b16 %v190, %v189
  %v205 = vpack.c.b16 %v192, %v191
  %v206 = vpack.c.b16 %v194, %v193
  %v207 = vpack.c.b16 %v196, %v195
  %v208 = vpack.c.b16 %v198, %v197
  %v209 = vpack.c.b16 %v200, %v199
  %v210 = vpack.c.b16 %v202, %v201
  %219 = vmatprep.subr.bf16.mxu0 0
  %220 = vmatpush1.bf16.msra.mxu0 %v203
  %221 = vmatprep.subr.bf16.mxu0 0
  %222 = vmatpush1.bf16.msra.mxu0 %v204
  %223 = vmatprep.subr.bf16.mxu0 0
  %224 = vmatpush1.bf16.msra.mxu0 %v205
  %225 = vmatprep.subr.bf16.mxu0 0
  %226 = vmatpush1.bf16.msra.mxu0 %v206
  %227 = vmatprep.subr.bf16.mxu0 0
  %228 = vmatpush1.bf16.msra.mxu0 %v207
  %229 = vmatprep.subr.bf16.mxu0 0
  %230 = vmatpush1.bf16.msra.mxu0 %v208
  %231 = vmatprep.subr.bf16.mxu0 0
  %232 = vmatpush1.bf16.msra.mxu0 %v209
  %233 = vmatprep.subr.bf16.mxu0 0
  %234 = vmatpush1.bf16.msra.mxu0 %v210
  %235 = vmatprep.subr.bf16.mxu0 0
  %236 = vmatpush1.bf16.msra.mxu0 0
  %237 = vmatprep.subr.bf16.mxu0 0
  %238 = vmatpush1.bf16.msra.mxu0 0
  %239 = vmatprep.subr.bf16.mxu0 0
  %240 = vmatpush1.bf16.msra.mxu0 0
  %241 = vmatprep.subr.bf16.mxu0 0
  %242 = vmatpush1.bf16.msra.mxu0 0
  %243 = vmatprep.subr.bf16.mxu0 0
  %244 = vmatpush1.bf16.msra.mxu0 0
  %245 = vmatprep.subr.bf16.mxu0 0
  %246 = vmatpush1.bf16.msra.mxu0 0
  %247 = vmatprep.subr.bf16.mxu0 0
  %248 = vmatpush1.bf16.msra.mxu0 0
  %249 = vmatprep.subr.bf16.mxu0 0
  %250 = vmatpush1.bf16.msra.mxu0 0
  %251 = vmatprep.mubr.bf16.mxu0 0
  %252 = vmatmul.mubr.bf16.gmra.mrb[0].mxu0 %v169
  %v253 = vpop.f32.mrb[0].mxu0
  %v254 = vadd.f32 %v152, %v253
  %v255 = vpop.f32.mrb[0].mxu0
  %v256 = vpop.f32.mrb[0].mxu0
  %v257 = vadd.f32 %v155, %v256
  %v258 = vpop.f32.mrb[0].mxu0
  %259 = vdwg.mxu0
  %v260 = vld [vmem:[#allocation2 + $0x8] sm:$0xff]
  %v261 = vld [vmem:[#allocation2 + $0x10] sm:$0x1]
  %s262 = scalar_lea.vmem %s1, 128
  %v263 = vld [vmem:[%s262] sm:$0xf]
  %v264 = vld [vmem:[%s262 + $0x4] sm:$0xf]
  %v265 = vld [vmem:[%s262 + $0x8] sm:$0xf]
  %v266 = vld [vmem:[%s262 + $0xc] sm:$0xf]
  %v267 = vld [vmem:[%s262 + $0x10] sm:$0xf]
  %v268 = vld [vmem:[%s262 + $0x14] sm:$0xf]
  %v269 = vld [vmem:[%s262 + $0x18] sm:$0xf]
  %v270 = vld [vmem:[%s262 + $0x1c] sm:$0xf]
  %v271 = vld [vmem:[%s262 + $0x20] sm:$0xf]
  %v272 = vld [vmem:[%s262 + $0x24] sm:$0xf]
  %v273 = vld [vmem:[%s262 + $0x28] sm:$0xf]
  %v274 = vld [vmem:[%s262 + $0x2c] sm:$0xf]
  %v275 = vld [vmem:[%s262 + $0x30] sm:$0xf]
  %v276 = vld [vmem:[%s262 + $0x34] sm:$0xf]
  %v277 = vld [vmem:[%s262 + $0x38] sm:$0xf]
  %v278 = vld [vmem:[%s262 + $0x3c] sm:$0xf]
  %vm279 = vsmask.f32 7424
  %v281 = vshrl.u32 %v260, 16
  %v283 = vshll.u32 %v260, 16
  %v285 = vrot.slane %v283, 1
  %v286 = vor.u32 %v281, %v285
  %v288 = vshll.u32 %v261, 16
  %v290 = vrot.slane %v288, 1
  %v291 = vsel %vm279, %v286, %v290
  %v309 = vunpack.c.l.b16 %v263
  %v310 = vunpack.c.l.b16 %v264
  %v311 = vunpack.c.l.b16 %v265
  %v312 = vunpack.c.l.b16 %v266
  %v313 = vunpack.c.l.b16 %v267
  %v314 = vunpack.c.l.b16 %v268
  %v315 = vunpack.c.l.b16 %v269
  %v316 = vunpack.c.l.b16 %v270
  %v317 = vunpack.c.l.b16 %v271
  %v318 = vunpack.c.l.b16 %v272
  %v319 = vunpack.c.l.b16 %v273
  %v320 = vunpack.c.l.b16 %v274
  %v321 = vunpack.c.l.b16 %v275
  %v322 = vunpack.c.l.b16 %v276
  %v323 = vunpack.c.l.b16 %v277
  %v324 = vunpack.c.l.b16 %v278
  %v325 = vpack.c.b16 %v310, %v309
  %v326 = vpack.c.b16 %v312, %v311
  %v327 = vpack.c.b16 %v314, %v313
  %v328 = vpack.c.b16 %v316, %v315
  %v329 = vpack.c.b16 %v318, %v317
  %v330 = vpack.c.b16 %v320, %v319
  %v331 = vpack.c.b16 %v322, %v321
  %v332 = vpack.c.b16 %v324, %v323
  %341 = vmatprep.subr.bf16.mxu0 0
  %342 = vmatpush1.bf16.msra.mxu0 %v325
  %343 = vmatprep.subr.bf16.mxu0 0
  %344 = vmatpush1.bf16.msra.mxu0 %v326
  %345 = vmatprep.subr.bf16.mxu0 0
  %346 = vmatpush1.bf16.msra.mxu0 %v327
  %347 = vmatprep.subr.bf16.mxu0 0
  %348 = vmatpush1.bf16.msra.mxu0 %v328
  %349 = vmatprep.subr.bf16.mxu0 0
  %350 = vmatpush1.bf16.msra.mxu0 %v329
  %351 = vmatprep.subr.bf16.mxu0 0
  %352 = vmatpush1.bf16.msra.mxu0 %v330
  %353 = vmatprep.subr.bf16.mxu0 0
  %354 = vmatpush1.bf16.msra.mxu0 %v331
  %355 = vmatprep.subr.bf16.mxu0 0
  %356 = vmatpush1.bf16.msra.mxu0 %v332
  %357 = vmatprep.subr.bf16.mxu0 0
  %358 = vmatpush1.bf16.msra.mxu0 0
  %359 = vmatprep.subr.bf16.mxu0 0
  %360 = vmatpush1.bf16.msra.mxu0 0
  %361 = vmatprep.subr.bf16.mxu0 0
  %362 = vmatpush1.bf16.msra.mxu0 0
  %363 = vmatprep.subr.bf16.mxu0 0
  %364 = vmatpush1.bf16.msra.mxu0 0
  %365 = vmatprep.subr.bf16.mxu0 0
  %366 = vmatpush1.bf16.msra.mxu0 0
  %367 = vmatprep.subr.bf16.mxu0 0
  %368 = vmatpush1.bf16.msra.mxu0 0
  %369 = vmatprep.subr.bf16.mxu0 0
  %370 = vmatpush1.bf16.msra.mxu0 0
  %371 = vmatprep.subr.bf16.mxu0 0
  %372 = vmatpush1.bf16.msra.mxu0 0
  %373 = vmatprep.mubr.bf16.mxu0 0
  %374 = vmatmul.mubr.bf16.gmra.mrb[0].mxu0 %v291
  %v375 = vpop.f32.mrb[0].mxu0
  %v376 = vadd.f32 0.0, %v375
  %v377 = vpop.f32.mrb[0].mxu0
  %v378 = vpop.f32.mrb[0].mxu0
  %v379 = vadd.f32 0.0, %v378
  %v380 = vpop.f32.mrb[0].mxu0
  %381 = vdwg.mxu0
  %v382 = vadd.f32 %v254, %v376
  %v383 = vadd.f32 %v257, %v379
  %v384 = vld [vmem:[%s3] sm:$0x1]
  %v385 = vlaneseq
  %v386 = vshrl.u32 %v385, 7
  %v387 = vsub.s32 0, %v386
  %v388 = vrot.slane %v384, %v387
  %v389 = vadd.f32 %v382, %v388
  %v390 = vadd.f32 %v383, %v388
  %v391 = vmax.f32 %v389, 0.0
  %v392 = vmax.f32 %v390, 0.0
  %v393 = vpack.c.bf16 %v392, %v391
  %394 = vst [vmem:[#allocation2 + $0x8] sm:$0xff] %v393
  %v395 = vld [vmem:[#allocation2] sm:$0x80]
  %v396 = vld [vmem:[#allocation2 + $0x8] sm:$0xff]
  %v397 = vld [vmem:[%s2] sm:$0xf]
  %v398 = vld [vmem:[%s2 + $0x4] sm:$0xf]
  %v399 = vld [vmem:[%s2 + $0x8] sm:$0xf]
  %v400 = vld [vmem:[%s2 + $0xc] sm:$0xf]
  %v401 = vld [vmem:[%s2 + $0x10] sm:$0xf]
  %v402 = vld [vmem:[%s2 + $0x14] sm:$0xf]
  %v403 = vld [vmem:[%s2 + $0x18] sm:$0xf]
  %v404 = vld [vmem:[%s2 + $0x1c] sm:$0xf]
  %v405 = vld [vmem:[%s2 + $0x20] sm:$0xf]
  %v406 = vld [vmem:[%s2 + $0x24] sm:$0xf]
  %v407 = vld [vmem:[%s2 + $0x28] sm:$0xf]
  %v408 = vld [vmem:[%s2 + $0x2c] sm:$0xf]
  %v409 = vld [vmem:[%s2 + $0x30] sm:$0xf]
  %v410 = vld [vmem:[%s2 + $0x34] sm:$0xf]
  %v411 = vld [vmem:[%s2 + $0x38] sm:$0xf]
  %v412 = vld [vmem:[%s2 + $0x3c] sm:$0xf]
  %s413 = scalar_lea.vmem %s2, 64
  %v414 = vld [vmem:[%s413] sm:$0xf]
  %v415 = vld [vmem:[%s413 + $0x4] sm:$0xf]
  %v416 = vld [vmem:[%s413 + $0x8] sm:$0xf]
  %v417 = vld [vmem:[%s413 + $0xc] sm:$0xf]
  %v418 = vld [vmem:[%s413 + $0x10] sm:$0xf]
  %v419 = vld [vmem:[%s413 + $0x14] sm:$0xf]
  %v420 = vld [vmem:[%s413 + $0x18] sm:$0xf]
  %v421 = vld [vmem:[%s413 + $0x1c] sm:$0xf]
  %v422 = vld [vmem:[%s413 + $0x20] sm:$0xf]
  %v423 = vld [vmem:[%s413 + $0x24] sm:$0xf]
  %v424 = vld [vmem:[%s413 + $0x28] sm:$0xf]
  %v425 = vld [vmem:[%s413 + $0x2c] sm:$0xf]
  %v426 = vld [vmem:[%s413 + $0x30] sm:$0xf]
  %v427 = vld [vmem:[%s413 + $0x34] sm:$0xf]
  %v428 = vld [vmem:[%s413 + $0x38] sm:$0xf]
  %v429 = vld [vmem:[%s413 + $0x3c] sm:$0xf]
  %v446 = vunpack.c.l.b16 %v414
  %v447 = vunpack.c.l.b16 %v415
  %v448 = vunpack.c.l.b16 %v416
  %v449 = vunpack.c.l.b16 %v417
  %v450 = vunpack.c.l.b16 %v418
  %v451 = vunpack.c.l.b16 %v419
  %v452 = vunpack.c.l.b16 %v420
  %v453 = vunpack.c.l.b16 %v421
  %v454 = vunpack.c.l.b16 %v422
  %v455 = vunpack.c.l.b16 %v423
  %v456 = vunpack.c.l.b16 %v424
  %v457 = vunpack.c.l.b16 %v425
  %v458 = vunpack.c.l.b16 %v426
  %v459 = vunpack.c.l.b16 %v427
  %v460 = vunpack.c.l.b16 %v428
  %v461 = vunpack.c.l.b16 %v429
  %v462 = vpack.c.b16 %v447, %v446
  %v463 = vpack.c.b16 %v449, %v448
  %v464 = vpack.c.b16 %v451, %v450
  %v465 = vpack.c.b16 %v453, %v452
  %v466 = vpack.c.b16 %v455, %v454
  %v467 = vpack.c.b16 %v457, %v456
  %v468 = vpack.c.b16 %v459, %v458
  %v469 = vpack.c.b16 %v461, %v460
  %478 = vmatprep.subr.bf16.mxu0 0
  %479 = vmatpush1.bf16.msra.mxu0 %v462
  %480 = vmatprep.subr.bf16.mxu0 0
  %481 = vmatpush1.bf16.msra.mxu0 %v463
  %482 = vmatprep.subr.bf16.mxu0 0
  %483 = vmatpush1.bf16.msra.mxu0 %v464
  %484 = vmatprep.subr.bf16.mxu0 0
  %485 = vmatpush1.bf16.msra.mxu0 %v465
  %486 = vmatprep.subr.bf16.mxu0 0
  %487 = vmatpush1.bf16.msra.mxu0 %v466
  %488 = vmatprep.subr.bf16.mxu0 0
  %489 = vmatpush1.bf16.msra.mxu0 %v467
  %490 = vmatprep.subr.bf16.mxu0 0
  %491 = vmatpush1.bf16.msra.mxu0 %v468
  %492 = vmatprep.subr.bf16.mxu0 0
  %493 = vmatpush1.bf16.msra.mxu0 %v469
  %494 = vmatprep.subr.bf16.mxu0 0
  %495 = vmatpush1.bf16.msra.mxu0 0
  %496 = vmatprep.subr.bf16.mxu0 0
  %497 = vmatpush1.bf16.msra.mxu0 0
  %498 = vmatprep.subr.bf16.mxu0 0
  %499 = vmatpush1.bf16.msra.mxu0 0
  %500 = vmatprep.subr.bf16.mxu0 0
  %501 = vmatpush1.bf16.msra.mxu0 0
  %502 = vmatprep.subr.bf16.mxu0 0
  %503 = vmatpush1.bf16.msra.mxu0 0
  %504 = vmatprep.subr.bf16.mxu0 0
  %505 = vmatpush1.bf16.msra.mxu0 0
  %506 = vmatprep.subr.bf16.mxu0 0
  %507 = vmatpush1.bf16.msra.mxu0 0
  %508 = vmatprep.subr.bf16.mxu0 0
  %509 = vmatpush1.bf16.msra.mxu0 0
  %510 = vmatprep.mubr.bf16.mxu0 0
  %511 = vmatmul.mubr.bf16.gmra.mrb[0].mxu0 %v396
  %v512 = vpop.f32.mrb[0].mxu0
  %v513 = vadd.f32 0.0, %v512
  %v514 = vpop.f32.mrb[0].mxu0
  %v515 = vpop.f32.mrb[0].mxu0
  %v516 = vadd.f32 0.0, %v515
  %v517 = vpop.f32.mrb[0].mxu0
  %518 = vdwg.mxu0
  %v520 = vshrl.u32 %v395, 16
  %v522 = vrot.slane %v520, 7
  %v524 = vshrl.u32 %v396, 16
  %v526 = vrot.slane %v524, 7
  %v527 = vshll.u32 %v396, 16
  %v529 = vor.u32 %v526, %v527
  %v530 = vsel %vm27, %v522, %v529
  %v548 = vunpack.c.l.b16 %v397
  %v549 = vunpack.c.l.b16 %v398
  %v550 = vunpack.c.l.b16 %v399
  %v551 = vunpack.c.l.b16 %v400
  %v552 = vunpack.c.l.b16 %v401
  %v553 = vunpack.c.l.b16 %v402
  %v554 = vunpack.c.l.b16 %v403
  %v555 = vunpack.c.l.b16 %v404
  %v556 = vunpack.c.l.b16 %v405
  %v557 = vunpack.c.l.b16 %v406
  %v558 = vunpack.c.l.b16 %v407
  %v559 = vunpack.c.l.b16 %v408
  %v560 = vunpack.c.l.b16 %v409
  %v561 = vunpack.c.l.b16 %v410
  %v562 = vunpack.c.l.b16 %v411
  %v563 = vunpack.c.l.b16 %v412
  %v564 = vpack.c.b16 %v549, %v548
  %v565 = vpack.c.b16 %v551, %v550
  %v566 = vpack.c.b16 %v553, %v552
  %v567 = vpack.c.b16 %v555, %v554
  %v568 = vpack.c.b16 %v557, %v556
  %v569 = vpack.c.b16 %v559, %v558
  %v570 = vpack.c.b16 %v561, %v560
  %v571 = vpack.c.b16 %v563, %v562
  %580 = vmatprep.subr.bf16.mxu0 0
  %581 = vmatpush1.bf16.msra.mxu0 %v564
  %582 = vmatprep.subr.bf16.mxu0 0
  %583 = vmatpush1.bf16.msra.mxu0 %v565
  %584 = vmatprep.subr.bf16.mxu0 0
  %585 = vmatpush1.bf16.msra.mxu0 %v566
  %586 = vmatprep.subr.bf16.mxu0 0
  %587 = vmatpush1.bf16.msra.mxu0 %v567
  %588 = vmatprep.subr.bf16.mxu0 0
  %589 = vmatpush1.bf16.msra.mxu0 %v568
  %590 = vmatprep.subr.bf16.mxu0 0
  %591 = vmatpush1.bf16.msra.mxu0 %v569
  %592 = vmatprep.subr.bf16.mxu0 0
  %593 = vmatpush1.bf16.msra.mxu0 %v570
  %594 = vmatprep.subr.bf16.mxu0 0
  %595 = vmatpush1.bf16.msra.mxu0 %v571
  %596 = vmatprep.subr.bf16.mxu0 0
  %597 = vmatpush1.bf16.msra.mxu0 0
  %598 = vmatprep.subr.bf16.mxu0 0
  %599 = vmatpush1.bf16.msra.mxu0 0
  %600 = vmatprep.subr.bf16.mxu0 0
  %601 = vmatpush1.bf16.msra.mxu0 0
  %602 = vmatprep.subr.bf16.mxu0 0
  %603 = vmatpush1.bf16.msra.mxu0 0
  %604 = vmatprep.subr.bf16.mxu0 0
  %605 = vmatpush1.bf16.msra.mxu0 0
  %606 = vmatprep.subr.bf16.mxu0 0
  %607 = vmatpush1.bf16.msra.mxu0 0
  %608 = vmatprep.subr.bf16.mxu0 0
  %609 = vmatpush1.bf16.msra.mxu0 0
  %610 = vmatprep.subr.bf16.mxu0 0
  %611 = vmatpush1.bf16.msra.mxu0 0
  %612 = vmatprep.mubr.bf16.mxu0 0
  %613 = vmatmul.mubr.bf16.gmra.mrb[0].mxu0 %v530
  %v614 = vpop.f32.mrb[0].mxu0
  %v615 = vadd.f32 %v513, %v614
  %v616 = vpop.f32.mrb[0].mxu0
  %v617 = vpop.f32.mrb[0].mxu0
  %v618 = vadd.f32 %v516, %v617
  %v619 = vpop.f32.mrb[0].mxu0
  %620 = vdwg.mxu0
  %v621 = vld [vmem:[#allocation2 + $0x8] sm:$0xff]
  %v622 = vld [vmem:[#allocation2 + $0x10] sm:$0x1]
  %s623 = scalar_lea.vmem %s2, 128
  %v624 = vld [vmem:[%s623] sm:$0xf]
  %v625 = vld [vmem:[%s623 + $0x4] sm:$0xf]
  %v626 = vld [vmem:[%s623 + $0x8] sm:$0xf]
  %v627 = vld [vmem:[%s623 + $0xc] sm:$0xf]
  %v628 = vld [vmem:[%s623 + $0x10] sm:$0xf]
  %v629 = vld [vmem:[%s623 + $0x14] sm:$0xf]
  %v630 = vld [vmem:[%s623 + $0x18] sm:$0xf]
  %v631 = vld [vmem:[%s623 + $0x1c] sm:$0xf]
  %v632 = vld [vmem:[%s623 + $0x20] sm:$0xf]
  %v633 = vld [vmem:[%s623 + $0x24] sm:$0xf]
  %v634 = vld [vmem:[%s623 + $0x28] sm:$0xf]
  %v635 = vld [vmem:[%s623 + $0x2c] sm:$0xf]
  %v636 = vld [vmem:[%s623 + $0x30] sm:$0xf]
  %v637 = vld [vmem:[%s623 + $0x34] sm:$0xf]
  %v638 = vld [vmem:[%s623 + $0x38] sm:$0xf]
  %v639 = vld [vmem:[%s623 + $0x3c] sm:$0xf]
  %v641 = vshrl.u32 %v621, 16
  %v643 = vshll.u32 %v621, 16
  %v645 = vrot.slane %v643, 1
  %v646 = vor.u32 %v641, %v645
  %v648 = vshll.u32 %v622, 16
  %v650 = vrot.slane %v648, 1
  %v651 = vsel %vm279, %v646, %v650
  %v669 = vunpack.c.l.b16 %v624
  %v670 = vunpack.c.l.b16 %v625
  %v671 = vunpack.c.l.b16 %v626
  %v672 = vunpack.c.l.b16 %v627
  %v673 = vunpack.c.l.b16 %v628
  %v674 = vunpack.c.l.b16 %v629
  %v675 = vunpack.c.l.b16 %v630
  %v676 = vunpack.c.l.b16 %v631
  %v677 = vunpack.c.l.b16 %v632
  %v678 = vunpack.c.l.b16 %v633
  %v679 = vunpack.c.l.b16 %v634
  %v680 = vunpack.c.l.b16 %v635
  %v681 = vunpack.c.l.b16 %v636
  %v682 = vunpack.c.l.b16 %v637
  %v683 = vunpack.c.l.b16 %v638
  %v684 = vunpack.c.l.b16 %v639
  %v685 = vpack.c.b16 %v670, %v669
  %v686 = vpack.c.b16 %v672, %v671
  %v687 = vpack.c.b16 %v674, %v673
  %v688 = vpack.c.b16 %v676, %v675
  %v689 = vpack.c.b16 %v678, %v677
  %v690 = vpack.c.b16 %v680, %v679
  %v691 = vpack.c.b16 %v682, %v681
  %v692 = vpack.c.b16 %v684, %v683
  %701 = vmatprep.subr.bf16.mxu0 0
  %702 = vmatpush1.bf16.msra.mxu0 %v685
  %703 = vmatprep.subr.bf16.mxu0 0
  %704 = vmatpush1.bf16.msra.mxu0 %v686
  %705 = vmatprep.subr.bf16.mxu0 0
  %706 = vmatpush1.bf16.msra.mxu0 %v687
  %707 = vmatprep.subr.bf16.mxu0 0
  %708 = vmatpush1.bf16.msra.mxu0 %v688
  %709 = vmatprep.subr.bf16.mxu0 0
  %710 = vmatpush1.bf16.msra.mxu0 %v689
  %711 = vmatprep.subr.bf16.mxu0 0
  %712 = vmatpush1.bf16.msra.mxu0 %v690
  %713 = vmatprep.subr.bf16.mxu0 0
  %714 = vmatpush1.bf16.msra.mxu0 %v691
  %715 = vmatprep.subr.bf16.mxu0 0
  %716 = vmatpush1.bf16.msra.mxu0 %v692
  %717 = vmatprep.subr.bf16.mxu0 0
  %718 = vmatpush1.bf16.msra.mxu0 0
  %719 = vmatprep.subr.bf16.mxu0 0
  %720 = vmatpush1.bf16.msra.mxu0 0
  %721 = vmatprep.subr.bf16.mxu0 0
  %722 = vmatpush1.bf16.msra.mxu0 0
  %723 = vmatprep.subr.bf16.mxu0 0
  %724 = vmatpush1.bf16.msra.mxu0 0
  %725 = vmatprep.subr.bf16.mxu0 0
  %726 = vmatpush1.bf16.msra.mxu0 0
  %727 = vmatprep.subr.bf16.mxu0 0
  %728 = vmatpush1.bf16.msra.mxu0 0
  %729 = vmatprep.subr.bf16.mxu0 0
  %730 = vmatpush1.bf16.msra.mxu0 0
  %731 = vmatprep.subr.bf16.mxu0 0
  %732 = vmatpush1.bf16.msra.mxu0 0
  %733 = vmatprep.mubr.bf16.mxu0 0
  %734 = vmatmul.mubr.bf16.gmra.mrb[0].mxu0 %v651
  %v735 = vpop.f32.mrb[0].mxu0
  %v736 = vadd.f32 0.0, %v735
  %v737 = vpop.f32.mrb[0].mxu0
  %v738 = vpop.f32.mrb[0].mxu0
  %v739 = vadd.f32 0.0, %v738
  %v740 = vpop.f32.mrb[0].mxu0
  %741 = vdwg.mxu0
  %v742 = vadd.f32 %v615, %v736
  %v743 = vadd.f32 %v618, %v739
  %v744 = vld [vmem:[%s3 + $0x1] sm:$0x1]
  %v745 = vlaneseq
  %v746 = vshrl.u32 %v745, 7
  %v747 = vsub.s32 0, %v746
  %v748 = vrot.slane %v744, %v747
  %v749 = vadd.f32 %v742, %v748
  %v750 = vadd.f32 %v743, %v748
  %v751 = vadd.f32 %v749, %v18
  %v752 = vadd.f32 %v750, %v19
  %v753 = vmax.f32 %v751, 0.0
  %v754 = vmax.f32 %v752, 0.0
  %755 = vst [vmem:[%s4] sm:$0xff] %v753
  %756 = vst [vmem:[%s4 + $0x8] sm:$0xff] %v754
  // Predicated region
  $region18: #{basic_block_forward.1} parent=0 // pred_check
    _
  $region19: #{basic_block_forward.1} parent=0 // pred_check_branch
    %758 = sbr.rel (0) target = $region21
  $region20: #{basic_block_forward.1} parent=0 // pred_region
    _
  $region21: #{basic_block_forward.1} parent=0 // pred_fallthru
    _
  // Predicated region
  $region22: #{basic_block_forward.1} parent=0 // pred_check
    _
  $region23: #{basic_block_forward.1} parent=0 // pred_check_branch
    %760 = sbr.rel (0) target = $region25
  $region24: #{basic_block_forward.1} parent=0 // pred_region
    _
  $region25: #{basic_block_forward.1} parent=0 // pred_fallthru
    _

</llo_original>
